<compile_context>
chip_gen: v7x
topology: tpu7x:2x2x1
jax: 0.10.0
libtpu: 0.0.40
codegen_flags: <defaults>
</compile_context>

<pallas_src>
import jax
import jax.numpy as jnp
from jax.experimental import pallas as pl
from jax.experimental.pallas import tpu as pltpu


def _precompute_kernel(x_ref, w_ref, a_ref, h_ref, s_ref):
    # h = x @ W (f32 accumulation on the MXU).
    h = jnp.dot(x_ref[...], w_ref[...], preferred_element_type=jnp.float32)
    # Fused matvecs: s[:, 0] = h @ a1, s[:, 1] = h @ a2 -- a single MXU call.
    s = jnp.dot(h, a_ref[...], preferred_element_type=jnp.float32)
    h_ref[...] = h.astype(jnp.bfloat16)   # bf16 copy feeds the big ee @ h matmul
    s_ref[...] = s


def _make_attn_kernel(alpha: float):
    def attn_kernel(s1_ref, s2t_ref, adj_ref, h_ref, out_ref):
        # e_ij = s1_i + s2_j for this row tile -> (TILE_I, N)
        e = s1_ref[...] + s2t_ref[...]
        # leaky relu (negative slope alpha), then exp(-.)
        # TODO(synk): no max-subtraction (matches the PyTorch reference); very
        # large-magnitude negative e can overflow exp at scale.
        lrelu = jnp.where(e > 0, e, alpha * e)
        ee = jnp.exp(-lrelu)
        # Mask to edges; adj is int8 so the O(N^2) tile costs 1/4 the DMA of f32.
        ee = jnp.where(adj_ref[...] != 0, ee, 0.0)
        # rowsum = ee @ ones(N, 1)  (lane reduction).
        rowsum = jnp.sum(ee, axis=1, keepdims=True)          # (TILE_I, 1)
        # h_prime tile = (ee @ h) / rowsum; MXU in bf16, f32 accumulation.
        hp = jnp.dot(ee.astype(jnp.bfloat16), h_ref[...],
                     preferred_element_type=jnp.float32)
        # Divide via the (otherwise idle) EUP instead of the VPU.
        # TODO(synk): rows with no edges give rowsum == 0 -> inf/nan, same as
        # the PyTorch module (its nan-asserts would fire); no eps guard added.
        out_ref[...] = hp * pl.reciprocal(rowsum, approx=True)

    return attn_kernel


def sp_graph_attention_layer(x, adj, W, a, alpha, *, row_tile=None):
    """Forward pass of SpGraphAttentionLayer (concat=False, inference mode)."""
    N, in_f = x.shape
    out_f = W.shape[1]

    # Fuse a1, a2 into one (out_f, 2) matrix -> one MXU call in pass 1.
    a_fused = jnp.concatenate(
        [a[0, :out_f].reshape(out_f, 1), a[0, out_f:].reshape(out_f, 1)], axis=1
    ).astype(jnp.float32)

    # ---------- Pass 1: h = x @ W, s = h @ [a1 | a2] (single small block) ----
    h_bf16, s = pl.pallas_call(
        _precompute_kernel,
        out_shape=(
            jax.ShapeDtypeStruct((N, out_f), jnp.bfloat16),
            jax.ShapeDtypeStruct((N, 2), jnp.float32),
        ),
        in_specs=[
            pl.BlockSpec((N, in_f), lambda: (0, 0)),
            pl.BlockSpec((in_f, out_f), lambda: (0, 0)),
            pl.BlockSpec((out_f, 2), lambda: (0, 0)),
        ],
        out_specs=(
            pl.BlockSpec((N, out_f), lambda: (0, 0)),
            pl.BlockSpec((N, 2), lambda: (0, 0)),
        ),
    )(x.astype(jnp.float32), W.astype(jnp.float32), a_fused)

    # Hoisted once (outside the row-tile loop): split s; lay s2 out as a row so
    # the per-tile body never transposes.
    s1 = s[:, 0:1]                       # (N, 1)
    s2t = s[:, 1:2].T                    # (1, N)

    # adj as int8: the O(N^2) term, 4x less DMA / VMEM residency than f32.
    adj_i8 = adj if adj.dtype == jnp.int8 else (adj != 0).astype(jnp.int8)

    # ---------- Pass 2: row-tiled masked attention + aggregation -------------
    if row_tile is None:
        row_tile = min(N, 256)
    if N % row_tile != 0 or row_tile % 8 != 0:
        row_tile = N                     # fall back to a single full block
    grid = (N // row_tile,)

    # VMEM budget: every input is double-buffered; keep headroom and never drop
    # below the default scoped limit.
    tile_bytes = 2 * (row_tile * N            # adj int8 tile
                      + row_tile * 4          # s1 tile
                      + N * 4                 # s2 row
                      + N * out_f * 2         # h (bf16, shared)
                      + row_tile * out_f * 4)  # out tile
    vmem_limit = int(max(32 * 1024 * 1024, 2 * tile_bytes))

    kernel = _make_attn_kernel(float(alpha))
    return pl.pallas_call(
        kernel,
        out_shape=jax.ShapeDtypeStruct((N, out_f), jnp.float32),
        grid=grid,
        in_specs=[
            pl.BlockSpec((row_tile, 1), lambda i: (i, 0)),   # s1 tile
            pl.BlockSpec((1, N), lambda i: (0, 0)),          # s2 row (shared)
            pl.BlockSpec((row_tile, N), lambda i: (i, 0)),   # adj tile (int8)
            pl.BlockSpec((N, out_f), lambda i: (0, 0)),      # h (shared, bf16)
        ],
        out_specs=pl.BlockSpec((row_tile, out_f), lambda i: (i, 0)),
        compiler_params=pltpu.CompilerParams(
            dimension_semantics=("parallel",),  # row tiles split across TCs (v7x)
            vmem_limit_bytes=vmem_limit,
        ),
    )(s1, s2t, adj_i8, h_bf16)


def xavier_normal(key, shape, gain):
    fan_in, fan_out = shape[0], shape[1]
    std = gain * jnp.sqrt(2.0 / (fan_in + fan_out))
    return std * jax.random.normal(key, shape, dtype=jnp.float32)


if __name__ == "__main__":
    # Small shapes consistent with the module's forward: N nodes, feature dims.
    N = 128
    in_features = 16
    out_features = 32
    alpha = 0.2  # LeakyReLU negative slope

    key = jax.random.PRNGKey(0)
    k_x, k_adj, k_w, k_a = jax.random.split(key, 4)

    # Deterministic parameter init (xavier_normal_, gain=1.414) — synthetic weights.
    W = xavier_normal(k_w, (in_features, out_features), gain=1.414)
    a = xavier_normal(k_a, (1, 2 * out_features), gain=1.414)

    # Node features and a random 0/1 adjacency with self-loops (avoids empty rows).
    x = jax.random.normal(k_x, (N, in_features), dtype=jnp.float32)
    adj = (jax.random.uniform(k_adj, (N, N)) < 0.1).astype(jnp.float32)
    adj = jnp.maximum(adj, jnp.eye(N, dtype=jnp.float32))

    out = sp_graph_attention_layer(x, adj, W, a, alpha, row_tile=64)
    out = jax.block_until_ready(out)

    # Pure-JAX f32 reference (dense-masked equivalent of the sparse COO path).
    pHI = jax.lax.Precision.HIGHEST
    h_ref = jnp.dot(x, W, precision=pHI)
    e_ref = jnp.dot(h_ref, a[0, :out_features], precision=pHI).reshape(N, 1) + \
        jnp.dot(h_ref, a[0, out_features:], precision=pHI).reshape(1, N)
    lrelu = jnp.where(e_ref > 0, e_ref, alpha * e_ref)
    ee = jnp.where(adj != 0, jnp.exp(-lrelu), 0.0)
    ref = jnp.dot(ee, h_ref, precision=pHI) / jnp.sum(ee, axis=1, keepdims=True)

    assert out.shape == (N, out_features)
    # bf16 MXU inputs + approx reciprocal -> slightly loosened tolerance vs f32 ref.
    err = float(jnp.max(jnp.abs(out - ref)))
    assert jnp.allclose(out, ref, atol=2e-2, rtol=2e-2), err
    print("KERNEL_OK")
</pallas_src>

<mosaic_0001>
module attributes {stable_mosaic.version = 11 : i64} {
  func.func @_precompute_kernel(%arg0: memref<128x16xf32, #tpu.memory_space<vmem>>, %arg1: memref<16x32xf32, #tpu.memory_space<vmem>>, %arg2: memref<32x2xf32, #tpu.memory_space<vmem>>, %arg3: memref<128x32xbf16, #tpu.memory_space<vmem>>, %arg4: memref<128x2xf32, #tpu.memory_space<vmem>>) attributes {dimension_semantics = [], scalar_prefetch = 0 : i64, scratch_operands = 0 : i64, tpu.core_type = #tpu.core_type<tc>} {
    %c0 = arith.constant 0 : index
    %c0_0 = arith.constant 0 : index
    %0 = vector.load %arg0[%c0, %c0_0] : memref<128x16xf32, #tpu.memory_space<vmem>>, vector<128x16xf32>
    %c0_1 = arith.constant 0 : index
    %c0_2 = arith.constant 0 : index
    %1 = vector.load %arg1[%c0_1, %c0_2] : memref<16x32xf32, #tpu.memory_space<vmem>>, vector<16x32xf32>
    %cst = arith.constant dense<0.000000e+00> : vector<128x32xf32>
    %2 = tpu.matmul %0, %1, %cst {dimension_numbers = #tpu.dot_dimension_numbers<[1], [0], [0], [1], [0, 0, 1, 1], [], []>} : vector<128x16xf32>, vector<16x32xf32>, vector<128x32xf32> -> vector<128x32xf32>
    %c0_3 = arith.constant 0 : index
    %c0_4 = arith.constant 0 : index
    %3 = vector.load %arg2[%c0_3, %c0_4] : memref<32x2xf32, #tpu.memory_space<vmem>>, vector<32x2xf32>
    %cst_5 = arith.constant dense<0.000000e+00> : vector<128x2xf32>
    %4 = tpu.matmul %2, %3, %cst_5 {dimension_numbers = #tpu.dot_dimension_numbers<[1], [0], [0], [1], [0, 0, 1, 1], [], []>} : vector<128x32xf32>, vector<32x2xf32>, vector<128x2xf32> -> vector<128x2xf32>
    %5 = arith.truncf %2 : vector<128x32xf32> to vector<128x32xbf16>
    %c0_6 = arith.constant 0 : index
    %c0_7 = arith.constant 0 : index
    %6 = vector.load %arg3[%c0_6, %c0_7] : memref<128x32xbf16, #tpu.memory_space<vmem>>, vector<128x32xbf16>
    tpu.vector_store %arg3[%c0_6, %c0_7], %5 {strides = array<i32>} : memref<128x32xbf16, #tpu.memory_space<vmem>>, vector<128x32xbf16>,
    %c0_8 = arith.constant 0 : index
    %c0_9 = arith.constant 0 : index
    %7 = vector.load %arg4[%c0_8, %c0_9] : memref<128x2xf32, #tpu.memory_space<vmem>>, vector<128x2xf32>
    tpu.vector_store %arg4[%c0_8, %c0_9], %4 {strides = array<i32>} : memref<128x2xf32, #tpu.memory_space<vmem>>, vector<128x2xf32>,
    return
  }
}

</mosaic_0001>

<llo_original>
// kernel: tpu_custom_call.1
$region0: #{tpu_custom_call.1}
  #allocation0 [shape = 'u32[]', space=smem, size = 0x4, offset = 0x4, fixed_abs, tag = 'smem constant byte address 0x4 - core index']
  #allocation1 [shape = 'u32[144,128]{1,0:T(1,128)}', space=vmem, size = 0x12000, scoped, tag = 'internal scratch']
  %s0 = inlined_call_operand.vmem [shape: f32[128,16], index: 0, kind: input, shape index: {}]
  %s1 = inlined_call_operand.vmem [shape: f32[16,32], index: 1, kind: input, shape index: {}]
  %s2 = inlined_call_operand.vmem [shape: f32[32,2], index: 2, kind: input, shape index: {}]
  %s3 = inlined_call_operand.vmem [shape: bf16[128,32], index: 3, kind: output, shape index: {0}]
  %s4 = inlined_call_operand.vmem [shape: f32[128,2], index: 4, kind: output, shape index: {1}]
  %5 = xla_tuple %s3, %s4
  %s6 = sld [smem:[#allocation0]]
  $region30: #{tpu_custom_call.1} parent=0
    _
  %s8 = ssub.s32 1, %s6
  %s9 = scalar_select 0, %s8, %s6
  // Predicated region
  $region2: #{tpu_custom_call.1} parent=0 // pred_check
    _
  $region3: #{tpu_custom_call.1} parent=0 // pred_check_branch
    %11 = sbr.rel (0) target = $region5
  $region4: #{tpu_custom_call.1} parent=0 // pred_region
    _
  $region5: #{tpu_custom_call.1} parent=0 // pred_fallthru
    _
  // Predicated region
  $region6: #{tpu_custom_call.1} parent=0 // pred_check
    _
  $region7: #{tpu_custom_call.1} parent=0 // pred_check_branch
    %13 = sbr.rel (0) target = $region9
  $region8: #{tpu_custom_call.1} parent=0 // pred_region
    _
  $region9: #{tpu_custom_call.1} parent=0 // pred_fallthru
    _
  // Predicated region
  $region10: #{tpu_custom_call.1} parent=0 // pred_check
    _
  $region11: #{tpu_custom_call.1} parent=0 // pred_check_branch
    %15 = sbr.rel (0) target = $region13
  $region12: #{tpu_custom_call.1} parent=0 // pred_region
    _
  $region13: #{tpu_custom_call.1} parent=0 // pred_fallthru
    _
  %v16 = vld [vmem:[%s0] sm:$0xff]
  %v17 = vld [vmem:[%s0 + $0x8] sm:$0xff]
  %v18 = vld [vmem:[%s0 + $0x10] sm:$0xff]
  %v19 = vld [vmem:[%s0 + $0x18] sm:$0xff]
  %v20 = vld [vmem:[%s0 + $0x20] sm:$0xff]
  %v21 = vld [vmem:[%s0 + $0x28] sm:$0xff]
  %v22 = vld [vmem:[%s0 + $0x30] sm:$0xff]
  %v23 = vld [vmem:[%s0 + $0x38] sm:$0xff]
  %v24 = vld [vmem:[%s0 + $0x40] sm:$0xff]
  %v25 = vld [vmem:[%s0 + $0x48] sm:$0xff]
  %v26 = vld [vmem:[%s0 + $0x50] sm:$0xff]
  %v27 = vld [vmem:[%s0 + $0x58] sm:$0xff]
  %v28 = vld [vmem:[%s0 + $0x60] sm:$0xff]
  %v29 = vld [vmem:[%s0 + $0x68] sm:$0xff]
  %v30 = vld [vmem:[%s0 + $0x70] sm:$0xff]
  %v31 = vld [vmem:[%s0 + $0x78] sm:$0xff]
  %v32 = vld [vmem:[%s1] sm:$0xff]
  %v33 = vld [vmem:[%s1 + $0x8] sm:$0xff]
  %vm34 = vcmask 130048
  %v36 = vsel %vm34, %v16, 0
  %v39 = vsel %vm34, %v17, 0
  %v42 = vsel %vm34, %v18, 0
  %v45 = vsel %vm34, %v19, 0
  %v48 = vsel %vm34, %v20, 0
  %v51 = vsel %vm34, %v21, 0
  %v54 = vsel %vm34, %v22, 0
  %v57 = vsel %vm34, %v23, 0
  %v60 = vsel %vm34, %v24, 0
  %v63 = vsel %vm34, %v25, 0
  %v66 = vsel %vm34, %v26, 0
  %v69 = vsel %vm34, %v27, 0
  %v72 = vsel %vm34, %v28, 0
  %v75 = vsel %vm34, %v29, 0
  %v78 = vsel %vm34, %v30, 0
  %v81 = vsel %vm34, %v31, 0
  %83 = vmatprep.subr.mxu0 0.0
  %84 = vmatpush1.msra.mxu0 %v32
  %85 = vmatprep.subr.mxu0 0.0
  %86 = vmatpush1.msra.mxu0 %v33
  %87 = vmatprep.subr.mxu0 0.0
  %88 = vmatpush1.msra.mxu0 0.0
  %89 = vmatprep.subr.mxu0 0.0
  %90 = vmatpush1.msra.mxu0 0.0
  %91 = vmatprep.subr.mxu0 0.0
  %92 = vmatpush1.msra.mxu0 0.0
  %93 = vmatprep.subr.mxu0 0.0
  %94 = vmatpush1.msra.mxu0 0.0
  %95 = vmatprep.subr.mxu0 0.0
  %96 = vmatpush1.msra.mxu0 0.0
  %97 = vmatprep.subr.mxu0 0.0
  %98 = vmatpush1.msra.mxu0 0.0
  %99 = vmatprep.subr.mxu0 0.0
  %100 = vmatpush1.msra.mxu0 0.0
  %101 = vmatprep.subr.mxu0 0.0
  %102 = vmatpush1.msra.mxu0 0.0
  %103 = vmatprep.subr.mxu0 0.0
  %104 = vmatpush1.msra.mxu0 0.0
  %105 = vmatprep.subr.mxu0 0.0
  %106 = vmatpush1.msra.mxu0 0.0
  %107 = vmatprep.subr.mxu0 0.0
  %108 = vmatpush1.msra.mxu0 0.0
  %109 = vmatprep.subr.mxu0 0.0
  %110 = vmatpush1.msra.mxu0 0.0
  %111 = vmatprep.subr.mxu0 0.0
  %112 = vmatpush1.msra.mxu0 0.0
  %113 = vmatprep.subr.mxu0 0.0
  %114 = vmatpush1.msra.mxu0 0.0
  %115 = vmatprep.subr.mxu0 0.0
  %116 = vmatpush1.msra.mxu0 0.0
  %117 = vmatprep.subr.mxu0 0.0
  %118 = vmatpush1.msra.mxu0 0.0
  %119 = vmatprep.subr.mxu0 0.0
  %120 = vmatpush1.msra.mxu0 0.0
  %121 = vmatprep.subr.mxu0 0.0
  %122 = vmatpush1.msra.mxu0 0.0
  %123 = vmatprep.subr.mxu0 0.0
  %124 = vmatpush1.msra.mxu0 0.0
  %125 = vmatprep.subr.mxu0 0.0
  %126 = vmatpush1.msra.mxu0 0.0
  %127 = vmatprep.subr.mxu0 0.0
  %128 = vmatpush1.msra.mxu0 0.0
  %129 = vmatprep.subr.mxu0 0.0
  %130 = vmatpush1.msra.mxu0 0.0
  %131 = vmatprep.subr.mxu0 0.0
  %132 = vmatpush1.msra.mxu0 0.0
  %133 = vmatprep.subr.mxu0 0.0
  %134 = vmatpush1.msra.mxu0 0.0
  %135 = vmatprep.subr.mxu0 0.0
  %136 = vmatpush1.msra.mxu0 0.0
  %137 = vmatprep.subr.mxu0 0.0
  %138 = vmatpush1.msra.mxu0 0.0
  %139 = vmatprep.subr.mxu0 0.0
  %140 = vmatpush1.msra.mxu0 0.0
  %141 = vmatprep.subr.mxu0 0.0
  %142 = vmatpush1.msra.mxu0 0.0
  %143 = vmatprep.subr.mxu0 0.0
  %144 = vmatpush1.msra.mxu0 0.0
  %145 = vmatprep.subr.mxu0 0.0
  %146 = vmatpush1.msra.mxu0 0.0
  %147 = vmatprep.mubr.f32.mxu0 0.0
  %148 = vmatmul.mubr.f32.gmra.mrb[0].mxu0 %v36
  %v149 = vpop.f32.mrb[0].mxu0
  %v150 = vadd.f32 0.0, %v149
  %v151 = vpop.f32.mrb[0].mxu0
  %152 = vmatprep.mubr.f32.mxu0 0.0
  %153 = vmatmul.mubr.f32.gmra.mrb[0].mxu0 %v39
  %v154 = vpop.f32.mrb[0].mxu0
  %v155 = vadd.f32 0.0, %v154
  %v156 = vpop.f32.mrb[0].mxu0
  %157 = vmatprep.mubr.f32.mxu0 0.0
  %158 = vmatmul.mubr.f32.gmra.mrb[0].mxu0 %v42
  %v159 = vpop.f32.mrb[0].mxu0
  %v160 = vadd.f32 0.0, %v159
  %v161 = vpop.f32.mrb[0].mxu0
  %162 = vmatprep.mubr.f32.mxu0 0.0
  %163 = vmatmul.mubr.f32.gmra.mrb[0].mxu0 %v45
  %v164 = vpop.f32.mrb[0].mxu0
  %v165 = vadd.f32 0.0, %v164
  %v166 = vpop.f32.mrb[0].mxu0
  %167 = vmatprep.mubr.f32.mxu0 0.0
  %168 = vmatmul.mubr.f32.gmra.mrb[0].mxu0 %v48
  %v169 = vpop.f32.mrb[0].mxu0
  %v170 = vadd.f32 0.0, %v169
  %v171 = vpop.f32.mrb[0].mxu0
  %172 = vmatprep.mubr.f32.mxu0 0.0
  %173 = vmatmul.mubr.f32.gmra.mrb[0].mxu0 %v51
  %v174 = vpop.f32.mrb[0].mxu0
  %v175 = vadd.f32 0.0, %v174
  %v176 = vpop.f32.mrb[0].mxu0
  %177 = vmatprep.mubr.f32.mxu0 0.0
  %178 = vmatmul.mubr.f32.gmra.mrb[0].mxu0 %v54
  %v179 = vpop.f32.mrb[0].mxu0
  %v180 = vadd.f32 0.0, %v179
  %v181 = vpop.f32.mrb[0].mxu0
  %182 = vmatprep.mubr.f32.mxu0 0.0
  %183 = vmatmul.mubr.f32.gmra.mrb[0].mxu0 %v57
  %v184 = vpop.f32.mrb[0].mxu0
  %v185 = vadd.f32 0.0, %v184
  %v186 = vpop.f32.mrb[0].mxu0
  %187 = vmatprep.mubr.f32.mxu0 0.0
  %188 = vmatmul.mubr.f32.gmra.mrb[0].mxu0 %v60
  %v189 = vpop.f32.mrb[0].mxu0
  %v190 = vadd.f32 0.0, %v189
  %v191 = vpop.f32.mrb[0].mxu0
  %192 = vmatprep.mubr.f32.mxu0 0.0
  %193 = vmatmul.mubr.f32.gmra.mrb[0].mxu0 %v63
  %v194 = vpop.f32.mrb[0].mxu0
  %v195 = vadd.f32 0.0, %v194
  %v196 = vpop.f32.mrb[0].mxu0
  %197 = vmatprep.mubr.f32.mxu0 0.0
  %198 = vmatmul.mubr.f32.gmra.mrb[0].mxu0 %v66
  %v199 = vpop.f32.mrb[0].mxu0
  %v200 = vadd.f32 0.0, %v199
  %v201 = vpop.f32.mrb[0].mxu0
  %202 = vmatprep.mubr.f32.mxu0 0.0
  %203 = vmatmul.mubr.f32.gmra.mrb[0].mxu0 %v69
  %v204 = vpop.f32.mrb[0].mxu0
  %v205 = vadd.f32 0.0, %v204
  %v206 = vpop.f32.mrb[0].mxu0
  %207 = vmatprep.mubr.f32.mxu0 0.0
  %208 = vmatmul.mubr.f32.gmra.mrb[0].mxu0 %v72
  %v209 = vpop.f32.mrb[0].mxu0
  %v210 = vadd.f32 0.0, %v209
  %v211 = vpop.f32.mrb[0].mxu0
  %212 = vmatprep.mubr.f32.mxu0 0.0
  %213 = vmatmul.mubr.f32.gmra.mrb[0].mxu0 %v75
  %v214 = vpop.f32.mrb[0].mxu0
  %v215 = vadd.f32 0.0, %v214
  %v216 = vpop.f32.mrb[0].mxu0
  %217 = vmatprep.mubr.f32.mxu0 0.0
  %218 = vmatmul.mubr.f32.gmra.mrb[0].mxu0 %v78
  %v219 = vpop.f32.mrb[0].mxu0
  %v220 = vadd.f32 0.0, %v219
  %v221 = vpop.f32.mrb[0].mxu0
  %222 = vmatprep.mubr.f32.mxu0 0.0
  %223 = vmatmul.mubr.f32.gmra.mrb[0].mxu0 %v81
  %v224 = vpop.f32.mrb[0].mxu0
  %v225 = vadd.f32 0.0, %v224
  %v226 = vpop.f32.mrb[0].mxu0
  %227 = vdwg.mxu0
  %v228 = vld [vmem:[%s2] sm:$0xff]
  %v229 = vld [vmem:[%s2 + $0x8] sm:$0xff]
  %v230 = vld [vmem:[%s2 + $0x10] sm:$0xff]
  %v231 = vld [vmem:[%s2 + $0x18] sm:$0xff]
  %vm232 = vcmask 261120
  %v234 = vsel %vm232, %v150, 0
  %v237 = vsel %vm232, %v155, 0
  %v240 = vsel %vm232, %v160, 0
  %v243 = vsel %vm232, %v165, 0
  %v246 = vsel %vm232, %v170, 0
  %v249 = vsel %vm232, %v175, 0
  %v252 = vsel %vm232, %v180, 0
  %v255 = vsel %vm232, %v185, 0
  %v258 = vsel %vm232, %v190, 0
  %v261 = vsel %vm232, %v195, 0
  %v264 = vsel %vm232, %v200, 0
  %v267 = vsel %vm232, %v205, 0
  %v270 = vsel %vm232, %v210, 0
  %v273 = vsel %vm232, %v215, 0
  %v276 = vsel %vm232, %v220, 0
  %v279 = vsel %vm232, %v225, 0
  %281 = vmatprep.subr.mxu0 0.0
  %282 = vmatpush1.msra.mxu0 %v228
  %283 = vmatprep.subr.mxu0 0.0
  %284 = vmatpush1.msra.mxu0 %v229
  %285 = vmatprep.subr.mxu0 0.0
  %286 = vmatpush1.msra.mxu0 %v230
  %287 = vmatprep.subr.mxu0 0.0
  %288 = vmatpush1.msra.mxu0 %v231
  %289 = vmatprep.subr.mxu0 0.0
  %290 = vmatpush1.msra.mxu0 0.0
  %291 = vmatprep.subr.mxu0 0.0
  %292 = vmatpush1.msra.mxu0 0.0
  %293 = vmatprep.subr.mxu0 0.0
  %294 = vmatpush1.msra.mxu0 0.0
  %295 = vmatprep.subr.mxu0 0.0
  %296 = vmatpush1.msra.mxu0 0.0
  %297 = vmatprep.subr.mxu0 0.0
  %298 = vmatpush1.msra.mxu0 0.0
  %299 = vmatprep.subr.mxu0 0.0
  %300 = vmatpush1.msra.mxu0 0.0
  %301 = vmatprep.subr.mxu0 0.0
  %302 = vmatpush1.msra.mxu0 0.0
  %303 = vmatprep.subr.mxu0 0.0
  %304 = vmatpush1.msra.mxu0 0.0
  %305 = vmatprep.subr.mxu0 0.0
  %306 = vmatpush1.msra.mxu0 0.0
  %307 = vmatprep.subr.mxu0 0.0
  %308 = vmatpush1.msra.mxu0 0.0
  %309 = vmatprep.subr.mxu0 0.0
  %310 = vmatpush1.msra.mxu0 0.0
  %311 = vmatprep.subr.mxu0 0.0
  %312 = vmatpush1.msra.mxu0 0.0
  %313 = vmatprep.subr.mxu0 0.0
  %314 = vmatpush1.msra.mxu0 0.0
  %315 = vmatprep.subr.mxu0 0.0
  %316 = vmatpush1.msra.mxu0 0.0
  %317 = vmatprep.subr.mxu0 0.0
  %318 = vmatpush1.msra.mxu0 0.0
  %319 = vmatprep.subr.mxu0 0.0
  %320 = vmatpush1.msra.mxu0 0.0
  %321 = vmatprep.subr.mxu0 0.0
  %322 = vmatpush1.msra.mxu0 0.0
  %323 = vmatprep.subr.mxu0 0.0
  %324 = vmatpush1.msra.mxu0 0.0
  %325 = vmatprep.subr.mxu0 0.0
  %326 = vmatpush1.msra.mxu0 0.0
  %327 = vmatprep.subr.mxu0 0.0
  %328 = vmatpush1.msra.mxu0 0.0
  %329 = vmatprep.subr.mxu0 0.0
  %330 = vmatpush1.msra.mxu0 0.0
  %331 = vmatprep.subr.mxu0 0.0
  %332 = vmatpush1.msra.mxu0 0.0
  %333 = vmatprep.subr.mxu0 0.0
  %334 = vmatpush1.msra.mxu0 0.0
  %335 = vmatprep.subr.mxu0 0.0
  %336 = vmatpush1.msra.mxu0 0.0
  %337 = vmatprep.subr.mxu0 0.0
  %338 = vmatpush1.msra.mxu0 0.0
  %339 = vmatprep.subr.mxu0 0.0
  %340 = vmatpush1.msra.mxu0 0.0
  %341 = vmatprep.subr.mxu0 0.0
  %342 = vmatpush1.msra.mxu0 0.0
  %343 = vmatprep.subr.mxu0 0.0
  %344 = vmatpush1.msra.mxu0 0.0
  %345 = vmatprep.mubr.f32.mxu0 0.0
  %346 = vmatmul.mubr.f32.gmra.mrb[0].mxu0 %v234
  %v347 = vpop.f32.mrb[0].mxu0
  %v348 = vadd.f32 0.0, %v347
  %v349 = vpop.f32.mrb[0].mxu0
  %350 = vmatprep.mubr.f32.mxu0 0.0
  %351 = vmatmul.mubr.f32.gmra.mrb[0].mxu0 %v237
  %v352 = vpop.f32.mrb[0].mxu0
  %v353 = vadd.f32 0.0, %v352
  %v354 = vpop.f32.mrb[0].mxu0
  %355 = vmatprep.mubr.f32.mxu0 0.0
  %356 = vmatmul.mubr.f32.gmra.mrb[0].mxu0 %v240
  %v357 = vpop.f32.mrb[0].mxu0
  %v358 = vadd.f32 0.0, %v357
  %v359 = vpop.f32.mrb[0].mxu0
  %360 = vmatprep.mubr.f32.mxu0 0.0
  %361 = vmatmul.mubr.f32.gmra.mrb[0].mxu0 %v243
  %v362 = vpop.f32.mrb[0].mxu0
  %v363 = vadd.f32 0.0, %v362
  %v364 = vpop.f32.mrb[0].mxu0
  %365 = vmatprep.mubr.f32.mxu0 0.0
  %366 = vmatmul.mubr.f32.gmra.mrb[0].mxu0 %v246
  %v367 = vpop.f32.mrb[0].mxu0
  %v368 = vadd.f32 0.0, %v367
  %v369 = vpop.f32.mrb[0].mxu0
  %370 = vmatprep.mubr.f32.mxu0 0.0
  %371 = vmatmul.mubr.f32.gmra.mrb[0].mxu0 %v249
  %v372 = vpop.f32.mrb[0].mxu0
  %v373 = vadd.f32 0.0, %v372
  %v374 = vpop.f32.mrb[0].mxu0
  %375 = vmatprep.mubr.f32.mxu0 0.0
  %376 = vmatmul.mubr.f32.gmra.mrb[0].mxu0 %v252
  %v377 = vpop.f32.mrb[0].mxu0
  %v378 = vadd.f32 0.0, %v377
  %v379 = vpop.f32.mrb[0].mxu0
  %380 = vmatprep.mubr.f32.mxu0 0.0
  %381 = vmatmul.mubr.f32.gmra.mrb[0].mxu0 %v255
  %v382 = vpop.f32.mrb[0].mxu0
  %v383 = vadd.f32 0.0, %v382
  %v384 = vpop.f32.mrb[0].mxu0
  %385 = vmatprep.mubr.f32.mxu0 0.0
  %386 = vmatmul.mubr.f32.gmra.mrb[0].mxu0 %v258
  %v387 = vpop.f32.mrb[0].mxu0
  %v388 = vadd.f32 0.0, %v387
  %v389 = vpop.f32.mrb[0].mxu0
  %390 = vmatprep.mubr.f32.mxu0 0.0
  %391 = vmatmul.mubr.f32.gmra.mrb[0].mxu0 %v261
  %v392 = vpop.f32.mrb[0].mxu0
  %v393 = vadd.f32 0.0, %v392
  %v394 = vpop.f32.mrb[0].mxu0
  %395 = vmatprep.mubr.f32.mxu0 0.0
  %396 = vmatmul.mubr.f32.gmra.mrb[0].mxu0 %v264
  %v397 = vpop.f32.mrb[0].mxu0
  %v398 = vadd.f32 0.0, %v397
  %v399 = vpop.f32.mrb[0].mxu0
  %400 = vmatprep.mubr.f32.mxu0 0.0
  %401 = vmatmul.mubr.f32.gmra.mrb[0].mxu0 %v267
  %v402 = vpop.f32.mrb[0].mxu0
  %v403 = vadd.f32 0.0, %v402
  %v404 = vpop.f32.mrb[0].mxu0
  %405 = vmatprep.mubr.f32.mxu0 0.0
  %406 = vmatmul.mubr.f32.gmra.mrb[0].mxu0 %v270
  %v407 = vpop.f32.mrb[0].mxu0
  %v408 = vadd.f32 0.0, %v407
  %v409 = vpop.f32.mrb[0].mxu0
  %410 = vmatprep.mubr.f32.mxu0 0.0
  %411 = vmatmul.mubr.f32.gmra.mrb[0].mxu0 %v273
  %v412 = vpop.f32.mrb[0].mxu0
  %v413 = vadd.f32 0.0, %v412
  %v414 = vpop.f32.mrb[0].mxu0
  %415 = vmatprep.mubr.f32.mxu0 0.0
  %416 = vmatmul.mubr.f32.gmra.mrb[0].mxu0 %v276
  %v417 = vpop.f32.mrb[0].mxu0
  %v418 = vadd.f32 0.0, %v417
  %v419 = vpop.f32.mrb[0].mxu0
  %420 = vmatprep.mubr.f32.mxu0 0.0
  %421 = vmatmul.mubr.f32.gmra.mrb[0].mxu0 %v279
  %v422 = vpop.f32.mrb[0].mxu0
  %v423 = vadd.f32 0.0, %v422
  %v424 = vpop.f32.mrb[0].mxu0
  %425 = vdwg.mxu0
  %v426 = vpack.c.bf16 %v155, %v150
  %v427 = vpack.c.bf16 %v165, %v160
  %v428 = vpack.c.bf16 %v175, %v170
  %v429 = vpack.c.bf16 %v185, %v180
  %v430 = vpack.c.bf16 %v195, %v190
  %v431 = vpack.c.bf16 %v205, %v200
  %v432 = vpack.c.bf16 %v215, %v210
  %v433 = vpack.c.bf16 %v225, %v220
  %v442 = vunpack.c.l.b16 %v426
  %v443 = vunpack.c.h.b16 %v426
  %v444 = vunpack.c.l.b16 %v427
  %v445 = vunpack.c.h.b16 %v427
  %v446 = vunpack.c.l.b16 %v428
  %v447 = vunpack.c.h.b16 %v428
  %v448 = vunpack.c.l.b16 %v429
  %v449 = vunpack.c.h.b16 %v429
  %v450 = vunpack.c.l.b16 %v430
  %v451 = vunpack.c.h.b16 %v430
  %v452 = vunpack.c.l.b16 %v431
  %v453 = vunpack.c.h.b16 %v431
  %v454 = vunpack.c.l.b16 %v432
  %v455 = vunpack.c.h.b16 %v432
  %v456 = vunpack.c.l.b16 %v433
  %v457 = vunpack.c.h.b16 %v433
  %v458 = vpack.c.b16 %v442, %v442
  %v459 = vpack.c.b16 %v443, %v443
  %v460 = vpack.c.b16 %v444, %v444
  %v461 = vpack.c.b16 %v445, %v445
  %v462 = vpack.c.b16 %v446, %v446
  %v463 = vpack.c.b16 %v447, %v447
  %v464 = vpack.c.b16 %v448, %v448
  %v465 = vpack.c.b16 %v449, %v449
  %v466 = vpack.c.b16 %v450, %v450
  %v467 = vpack.c.b16 %v451, %v451
  %v468 = vpack.c.b16 %v452, %v452
  %v469 = vpack.c.b16 %v453, %v453
  %v470 = vpack.c.b16 %v454, %v454
  %v471 = vpack.c.b16 %v455, %v455
  %v472 = vpack.c.b16 %v456, %v456
  %v473 = vpack.c.b16 %v457, %v457
  %vm490 = vcmask 257024
  %491 = vst.msk [vmem:[%s3] sm:$0xf] %vm490, %v458
  %492 = vst.msk [vmem:[%s3 + $0x4] sm:$0xf] %vm490, %v459
  %493 = vst.msk [vmem:[%s3 + $0x8] sm:$0xf] %vm490, %v460
  %494 = vst.msk [vmem:[%s3 + $0xc] sm:$0xf] %vm490, %v461
  %495 = vst.msk [vmem:[%s3 + $0x10] sm:$0xf] %vm490, %v462
  %496 = vst.msk [vmem:[%s3 + $0x14] sm:$0xf] %vm490, %v463
  %497 = vst.msk [vmem:[%s3 + $0x18] sm:$0xf] %vm490, %v464
  %498 = vst.msk [vmem:[%s3 + $0x1c] sm:$0xf] %vm490, %v465
  %499 = vst.msk [vmem:[%s3 + $0x20] sm:$0xf] %vm490, %v466
  %500 = vst.msk [vmem:[%s3 + $0x24] sm:$0xf] %vm490, %v467
  %501 = vst.msk [vmem:[%s3 + $0x28] sm:$0xf] %vm490, %v468
  %502 = vst.msk [vmem:[%s3 + $0x2c] sm:$0xf] %vm490, %v469
  %503 = vst.msk [vmem:[%s3 + $0x30] sm:$0xf] %vm490, %v470
  %504 = vst.msk [vmem:[%s3 + $0x34] sm:$0xf] %vm490, %v471
  %505 = vst.msk [vmem:[%s3 + $0x38] sm:$0xf] %vm490, %v472
  %506 = vst.msk [vmem:[%s3 + $0x3c] sm:$0xf] %vm490, %v473
  %vm507 = vcmask 15360
  %508 = vst.msk [vmem:[%s4] sm:$0xff] %vm507, %v348
  %509 = vst.msk [vmem:[%s4 + $0x8] sm:$0xff] %vm507, %v353
  %510 = vst.msk [vmem:[%s4 + $0x10] sm:$0xff] %vm507, %v358
  %511 = vst.msk [vmem:[%s4 + $0x18] sm:$0xff] %vm507, %v363
  %512 = vst.msk [vmem:[%s4 + $0x20] sm:$0xff] %vm507, %v368
  %513 = vst.msk [vmem:[%s4 + $0x28] sm:$0xff] %vm507, %v373
  %514 = vst.msk [vmem:[%s4 + $0x30] sm:$0xff] %vm507, %v378
  %515 = vst.msk [vmem:[%s4 + $0x38] sm:$0xff] %vm507, %v383
  %516 = vst.msk [vmem:[%s4 + $0x40] sm:$0xff] %vm507, %v388
  %517 = vst.msk [vmem:[%s4 + $0x48] sm:$0xff] %vm507, %v393
  %518 = vst.msk [vmem:[%s4 + $0x50] sm:$0xff] %vm507, %v398
  %519 = vst.msk [vmem:[%s4 + $0x58] sm:$0xff] %vm507, %v403
  %520 = vst.msk [vmem:[%s4 + $0x60] sm:$0xff] %vm507, %v408
  %521 = vst.msk [vmem:[%s4 + $0x68] sm:$0xff] %vm507, %v413
  %522 = vst.msk [vmem:[%s4 + $0x70] sm:$0xff] %vm507, %v418
  %523 = vst.msk [vmem:[%s4 + $0x78] sm:$0xff] %vm507, %v423
  // Predicated region
  $region14: #{tpu_custom_call.1} parent=0 // pred_check
    _
  $region15: #{tpu_custom_call.1} parent=0 // pred_check_branch
    %525 = sbr.rel (0) target = $region17
  $region16: #{tpu_custom_call.1} parent=0 // pred_region
    _
  $region17: #{tpu_custom_call.1} parent=0 // pred_fallthru
    _
  // Predicated region
  $region18: #{tpu_custom_call.1} parent=0 // pred_check
    _
  $region19: #{tpu_custom_call.1} parent=0 // pred_check_branch
    %527 = sbr.rel (0) target = $region21
  $region20: #{tpu_custom_call.1} parent=0 // pred_region
    _
  $region21: #{tpu_custom_call.1} parent=0 // pred_fallthru
    _
  // Predicated region
  $region22: #{tpu_custom_call.1} parent=0 // pred_check
    _
  $region23: #{tpu_custom_call.1} parent=0 // pred_check_branch
    %529 = sbr.rel (0) target = $region25
  $region24: #{tpu_custom_call.1} parent=0 // pred_region
    _
  $region25: #{tpu_custom_call.1} parent=0 // pred_fallthru
    _
  // Predicated region
  $region26: #{tpu_custom_call.1} parent=0 // pred_check
    _
  $region27: #{tpu_custom_call.1} parent=0 // pred_check_branch
    %531 = sbr.rel (0) target = $region29
  $region28: #{tpu_custom_call.1} parent=0 // pred_region
    _
  $region29: #{tpu_custom_call.1} parent=0 // pred_fallthru
    _

</llo_original>
